<compile_context>
chip_gen: v5e
topology: v5e:2x2
jax: 0.10.0
libtpu: 0.0.40
codegen_flags: <defaults>
</compile_context>

<pallas_src>
import jax
import jax.numpy as jnp
from jax.experimental import pallas as pl
from jax.experimental.pallas import tpu as pltpu

_LANE = 128


def _round_up(n: int, m: int) -> int:
    return ((n + m - 1) // m) * m


def _linear_kernel(x_ref, w_ref, b_ref, o_ref):
    # x_ref: (TB, F) VMEM   w_ref: (1, F) VMEM   b_ref: (1, 1) SMEM
    # o_ref: (1, TB) VMEM   (lane-dense output chunk for this batch tile)
    x = x_ref[...]                      # (TB, F) f32
    w = w_ref[...]                      # (1, F)  f32, broadcast over rows
    bias = b_ref[0, 0]                  # scalar read from SMEM

    # VPU elementwise multiply + XLU lane reduction, f32 accumulation.
    # The MXU stays idle on purpose: this op is HBM-bound and an N=1 matmul
    # would only add a lane-padded weight tile plus MXU push/pop latency.
    row_sums = jnp.sum(x * w, axis=-1)  # (TB,)

    o_ref[0, :] = (row_sums + bias).astype(o_ref.dtype)


def _choose_tile(B: int, F: int) -> tuple[int, int]:
    """Pick the batch-tile size TB and grid size G = cdiv(B, TB)."""
    row_hbm = 4 * F                     # bytes of x actually moved per row
    row_vmem = 4 * max(F, _LANE)        # lane-padded on-chip footprint per row
    # ~4 MiB of x streamed per grid step; <= ~8 MiB of VMEM per buffer.
    tb = min((4 << 20) // row_hbm, (8 << 20) // row_vmem)
    # Keep G >= 2 so both v7x TensorCores stream when the batch allows it.
    tb = min(tb, _round_up(pl.cdiv(B, 2), _LANE))
    # Multiple of 128 -> unmasked lane-dense stores and 8-divisible sublanes.
    tb = max(_LANE, (tb // _LANE) * _LANE)
    if tb >= B:
        return B, 1                     # one full-extent block (always legal)
    return tb, pl.cdiv(B, tb)


def linear_net(x, weight, bias):
    """Forward of LinearNet: y = x @ weight.T + bias.

    x:      (B, F) float32
    weight: (1, F) float32   (PyTorch nn.Linear(n_feature, 1) weight layout)
    bias:   (1,)   float32
    returns (B, 1) float32
    """
    B, F = x.shape
    assert weight.shape == (1, F)
    assert bias.shape == (1,)

    TB, G = _choose_tile(B, F)

    # Scoped-VMEM limit: room for 2 lane-padded x buffers plus slack, never
    # above ~48 MiB so it also fits v7x's 64 MiB physical VMEM per core.
    tile_vmem = TB * 4 * max(F, _LANE)
    vmem_limit = int(min(48 << 20, max(32 << 20, 2 * tile_vmem + (4 << 20))))

    b2 = bias.reshape(1, 1)

    out = pl.pallas_call(
        _linear_kernel,
        out_shape=jax.ShapeDtypeStruct((1, G * TB), jnp.float32),
        grid_spec=pltpu.PrefetchScalarGridSpec(
            num_scalar_prefetch=0,
            grid=(G,),
            in_specs=[
                # x row-tile; last block is ragged when B % TB != 0 (no pad).
                pl.BlockSpec((TB, F), lambda i: (i, 0)),
                # Weight: same block index every step -> not re-fetched.
                pl.BlockSpec((1, F), lambda i: (0, 0)),
                # Bias scalar in SMEM.
                pl.BlockSpec(memory_space=pltpu.MemorySpace.SMEM),
            ],
            # Lane-dense output slab: one (1, TB) chunk per grid step.
            out_specs=pl.BlockSpec((1, TB), lambda i: (0, i)),
        ),
        compiler_params=pltpu.CompilerParams(
            dimension_semantics=("parallel",),  # independent batch tiles
            vmem_limit_bytes=vmem_limit,
        ),
        cost_estimate=pl.CostEstimate(
            flops=2 * B * F,
            transcendentals=0,
            bytes_accessed=4 * (B * F + F + B + 1),
        ),
    )(x, weight, b2)

    # (1, G*TB) lane-dense slab -> (B, 1). Positions past B (ragged tail of
    # the last tile) hold garbage and are dropped here; nothing else reads
    # the raw slab.
    return out[0, :B].reshape(B, 1)


if __name__ == "__main__":
    key = jax.random.PRNGKey(0)
    k_x, k_w, k_b = jax.random.split(key, 3)

    batch = 8
    n_feature = 32

    x = jax.random.normal(k_x, (batch, n_feature), dtype=jnp.float32)
    # Deterministic parameter init (shapes match nn.Linear(n_feature, 1)).
    weight = jax.random.uniform(
        k_w, (1, n_feature), dtype=jnp.float32, minval=-0.1, maxval=0.1
    )
    bias = jax.random.uniform(
        k_b, (1,), dtype=jnp.float32, minval=-0.1, maxval=0.1
    )

    y = jax.block_until_ready(linear_net(x, weight, bias))

    # Reference check against plain JAX.
    y_ref = x @ weight.T + bias
    assert y.shape == (batch, 1)
    assert jnp.allclose(y, y_ref, atol=1e-5, rtol=1e-5)

    print("KERNEL_OK")
</pallas_src>

<mosaic_0001>
module attributes {stable_mosaic.version = 11 : i64} {
  func.func @_linear_kernel(%arg0: i32, %arg1: memref<8x32xf32, #tpu.memory_space<vmem>>, %arg2: memref<1x32xf32, #tpu.memory_space<vmem>>, %arg3: memref<1x1xf32, #tpu.memory_space<smem>>, %arg4: memref<1x8xf32, #tpu.memory_space<vmem>>) attributes {dimension_semantics = [#tpu.dimension_semantics<parallel>], iteration_bounds = array<i64: 1>, scalar_prefetch = 0 : i64, scratch_operands = 0 : i64, tpu.core_type = #tpu.core_type<tc>, window_params = [{transform_indices = @transform_0, window_bounds = array<i64: 8, 32>}, {pipeline_mode = #tpu.pipeline_mode<synchronous>, transform_indices = @transform_1, window_bounds = array<i64: 1, 32>}, {transform_indices = @transform_2, window_bounds = array<i64: 1, 1>}, {transform_indices = @transform_3, window_bounds = array<i64: 1, 8>}]} {
    %c0 = arith.constant 0 : index
    %c0_0 = arith.constant 0 : index
    %0 = vector.load %arg1[%c0, %c0_0] : memref<8x32xf32, #tpu.memory_space<vmem>>, vector<8x32xf32>
    %c0_1 = arith.constant 0 : index
    %c0_2 = arith.constant 0 : index
    %1 = vector.load %arg2[%c0_1, %c0_2] : memref<1x32xf32, #tpu.memory_space<vmem>>, vector<1x32xf32>
    %c0_3 = arith.constant 0 : index
    %c0_4 = arith.constant 0 : index
    %2 = memref.load %arg3[%c0_3, %c0_4] : memref<1x1xf32, #tpu.memory_space<smem>>
    %3 = vector.broadcast %1 : vector<1x32xf32> to vector<8x32xf32>
    %4 = arith.mulf %0, %3 : vector<8x32xf32>
    %cst = arith.constant dense<0.000000e+00> : vector<8xf32>
    %5 = vector.multi_reduction <add>, %4, %cst [1] : vector<8x32xf32> to vector<8xf32>
    %6 = vector.broadcast %2 : f32 to vector<8xf32>
    %7 = arith.addf %5, %6 : vector<8xf32>
    %c0_5 = arith.constant 0 : index
    %c0_6 = arith.constant 0 : index
    %8 = vector.load %arg4[%c0_5, %c0_6] : memref<1x8xf32, #tpu.memory_space<vmem>>, vector<1x8xf32>
    %9 = vector.shape_cast %8 : vector<1x8xf32> to vector<8xf32>
    %10 = vector.shape_cast %7 : vector<8xf32> to vector<1x8xf32>
    tpu.vector_store %arg4[%c0_5, %c0_6], %10 {strides = array<i32>} : memref<1x8xf32, #tpu.memory_space<vmem>>, vector<1x8xf32>,
    return
  }
  func.func @transform_0(%arg0: i32) -> (i32, i32) {
    %c0_i32 = arith.constant 0 : i32
    %c0_i32_0 = arith.constant 0 : i32
    return %arg0, %c0_i32 : i32, i32
  }
  func.func @transform_1(%arg0: i32) -> (i32, i32) {
    %c0_i32 = arith.constant 0 : i32
    %c0_i32_0 = arith.constant 0 : i32
    %c0_i32_1 = arith.constant 0 : i32
    return %c0_i32, %c0_i32_0 : i32, i32
  }
  func.func @transform_2(%arg0: i32) -> (i32, i32) {
    %c0_i32 = arith.constant 0 : i32
    %c0_i32_0 = arith.constant 0 : i32
    %c0_i32_1 = arith.constant 0 : i32
    return %c0_i32, %c0_i32_0 : i32, i32
  }
  func.func @transform_3(%arg0: i32) -> (i32, i32) {
    %c0_i32 = arith.constant 0 : i32
    %c0_i32_0 = arith.constant 0 : i32
    return %c0_i32, %arg0 : i32, i32
  }
}

</mosaic_0001>

<llo_original>
// kernel: tpu_custom_call.1
$region0: #{tpu_custom_call.1}
  #allocation0 [shape = 'u32[]', space=smem, size = 0x4, offset = 0x4, fixed_abs, tag = 'smem constant byte address 0x4 - core index']
  #allocation1 [shape = 'u32[72,128]{1,0:T(1,128)}', space=vmem, size = 0x9000, scoped, tag = 'internal scratch']
  #allocation2 [shape = 'f32[1,1]{1,0:T(1,128)S(6)}', space=smem, size = 0x200, scoped, tag = 'scoped memory for tpu_custom_call.1']
  %s0 = inlined_call_operand.hbm [shape: f32[8,32], index: 0, kind: input, shape index: {}]
  %s1 = inlined_call_operand.vmem [shape: f32[1,32], index: 1, kind: input, shape index: {}]
  %s2 = inlined_call_operand.<no memory space> [shape: f32[1,1], index: 2, kind: input, shape index: {}]
  %s3 = inlined_call_operand.hbm [shape: f32[1,8], index: 3, kind: output, shape index: {}]
  %s4 = sld [smem:[#allocation0]]
  $region26: #{tpu_custom_call.1} parent=0
    _
  %s6 = ssub.s32 1, %s4
  %s7 = scalar_select 0, %s6, %s4
  %8 = sst [smem:[#allocation2]] %s2
  $region1: #{tpu_custom_call.1} parent=0
    #allocation3 [shape = 'u8[4096]{0}', space=vmem, size = 0x1000, scoped, tag = 'input window, operand 0, single buffered']
    #allocation4 [shape = 's32[1]{0}', space=sflag, size = 0x4, scoped, tag = 'scoped memory for tpu_custom_call.1']
    #allocation5 [shape = 's32[1]{0}', space=sflag, size = 0x4, scoped, tag = 'scoped memory for tpu_custom_call.1']
    #allocation6 [shape = 'u8[512]{0}', space=vmem, size = 0x400, scoped, tag = 'output window, operand 0, single buffered']
    %9 = vsyncpa [#allocation4], 0
    %10 = vsyncpa [#allocation5], 0
    // Predicated region
    $region2: #{tpu_custom_call.1} parent=1 // pred_check
      _
    $region3: #{tpu_custom_call.1} parent=1 // pred_check_branch
      %12 = sbr.rel (0) target = $region5
    $region4: #{tpu_custom_call.1} parent=1 // pred_region
      %14 = vsyncadd [#allocation4], 0
      %s16 = sshll.u32 %s0, 4
      %s17 = int_to_ptr.hbm [resolvable:$true] %s16
      %s18 = sshll.u32 [#allocation3], 4
      %s19 = int_to_ptr.vmem [resolvable:$true] %s18
      %21 = dma.hbm_to_vmem [thread:$0]  %s17, 128, %s19, [#allocation4]
    $region5: #{tpu_custom_call.1} parent=1 // pred_fallthru
      _
    // Predicated region
    $region6: #{tpu_custom_call.1} parent=1 // pred_check
      _
    $region7: #{tpu_custom_call.1} parent=1 // pred_check_branch
      %23 = sbr.rel (0) target = $region9
    $region8: #{tpu_custom_call.1} parent=1 // pred_region
      _
    $region9: #{tpu_custom_call.1} parent=1 // pred_fallthru
      _
    // Predicated region
    $region10: #{tpu_custom_call.1} parent=1 // pred_check
      _
    $region11: #{tpu_custom_call.1} parent=1 // pred_check_branch
      %25 = sbr.rel (0) target = $region13
    $region12: #{tpu_custom_call.1} parent=1 // pred_region
      _
    $region13: #{tpu_custom_call.1} parent=1 // pred_fallthru
      _
    // Predicated region
    $region14: #{tpu_custom_call.1} parent=1 // pred_check
      _
    $region15: #{tpu_custom_call.1} parent=1 // pred_check_branch
      %27 = sbr.rel (0) target = $region17
    $region16: #{tpu_custom_call.1} parent=1 // pred_region
      %29 = dma.done [#allocation4], 128
    $region17: #{tpu_custom_call.1} parent=1 // pred_fallthru
      _
    %v30 = vld [vmem:[#allocation3] sm:$0xff]
    %v31 = vld [vmem:[%s1] sm:$0x1]
    %s32 = sld [smem:[#allocation2]]
    %v34 = vperm.slane %v31, 0
    %v36 = vmul.f32 %v30, %v34
    %vm37 = vcmask 261120
    %v38 = vsel %vm37, %v36, 0.0
    %39 = vadd.xlane.f32.xlu0 %v38
    %v40 = vpop.xlane.xlu0 %39
    %v41 = vstv %s32
    %v42 = vadd.f32 %v40, %v41
    %v44 = vlaneseq
    %v45 = vand.u32 %v44, 127
    %v46 = vperm.slane %v42, %v45
    %vm48 = vcmask 57344
    %49 = vst.msk [vmem:[#allocation6] sm:$0x1] %vm48, %v46
    // Predicated region
    $region18: #{tpu_custom_call.1} parent=1 // pred_check
      _
    $region19: #{tpu_custom_call.1} parent=1 // pred_check_branch
      %51 = sbr.rel (0) target = $region21
    $region20: #{tpu_custom_call.1} parent=1 // pred_region
      %53 = vsyncadd [#allocation5], 0
      %s55 = sshll.u32 [#allocation6], 4
      %s56 = int_to_ptr.vmem [resolvable:$true] %s55
      %s57 = sshll.u32 %s3, 4
      %s58 = int_to_ptr.hbm [resolvable:$true] %s57
      %60 = dma.vmem_to_hbm [thread:$0]  %s56, 16, %s58, [#allocation5]
    $region21: #{tpu_custom_call.1} parent=1 // pred_fallthru
      _
    // Predicated region
    $region22: #{tpu_custom_call.1} parent=1 // pred_check
      _
    $region23: #{tpu_custom_call.1} parent=1 // pred_check_branch
      %62 = sbr.rel (0) target = $region25
    $region24: #{tpu_custom_call.1} parent=1 // pred_region
      %64 = dma.done [#allocation5], 16
    $region25: #{tpu_custom_call.1} parent=1 // pred_fallthru
      _
    %65 = vsyncpa [#allocation4], 1
    %66 = vsyncpa [#allocation5], 1

</llo_original>
